<compile_context>
chip_gen: v7x
topology: tpu7x:2x2x1
jax: 0.10.0
libtpu: 0.0.40
codegen_flags: <defaults>
</compile_context>

<pallas_src>
import functools

import jax
import jax.numpy as jnp
from jax.experimental import pallas as pl
from jax.experimental.pallas import tpu as pltpu

_LANES = 128
_SUBLANES = 8
_PAD_LOGIT = -1e4      # padding logit: sigmoid->0, bce->0, focal->0 exactly
_MAX_CHUNK = 512       # (512, 8, 128) f32 block = 2 MiB -> ~8 MiB staged


def _combined_loss_sums_kernel(pred_ref, true_ref, out_ref, acc_ref, *,
                               gamma, alpha0, alpha1):
    """Accumulates [sum(p*y), sum(p), sum(y), sum(focal)] per outer slice."""
    i = pl.program_id(1)

    @pl.when(i == 0)
    def _init():
        acc_ref[...] = jnp.zeros_like(acc_ref)

    x = pred_ref[...].astype(jnp.float32)   # logits,  (chunk, 8, 128)
    y = true_ref[...].astype(jnp.float32)   # targets in [0, 1]

    # Stable sigmoid reusing exp(-|x|) that the stable BCE needs anyway
    # (saves one EUP exp per element vs. calling sigmoid separately).
    e = jnp.exp(-jnp.abs(x))
    inv = 1.0 / (1.0 + e)
    p = jnp.where(x >= 0.0, inv, e * inv)                 # == sigmoid(x)

    # binary_cross_entropy_with_logits, reduction='none' (numerically stable):
    bce = jnp.maximum(x, 0.0) - x * y + jnp.log1p(e)

    # Focal terms.  p_t = exp(-bce) matches the PyTorch module semantics.
    p_t = jnp.exp(-bce)
    m = 1.0 - p_t
    if gamma == 2.0:                                      # default: one VPU mul
        modulating = m * m
    elif float(gamma).is_integer() and 0 <= gamma <= 8:   # small integer powers
        modulating = jnp.ones_like(m)
        for _ in range(int(gamma)):
            modulating = modulating * m
    else:
        modulating = m ** gamma                           # generic pow (EUP)
    alpha_t = alpha1 * y + alpha0 * (1.0 - y)
    focal_elem = alpha_t * modulating * bce

    # Per-block partial sums kept at (8, 128) vreg granularity: reducing the
    # leading chunk axis is plain vreg adds on the VPU (no XLU / scalar work
    # in the hot loop).
    acc_ref[0] += jnp.sum(p * y, axis=0)      # intersection
    acc_ref[1] += jnp.sum(p, axis=0)          # sum of predictions
    acc_ref[2] += jnp.sum(y, axis=0)          # sum of targets
    acc_ref[3] += jnp.sum(focal_elem, axis=0)  # focal sum

    @pl.when(i == pl.num_programs(1) - 1)
    def _finalize():
        # Single sublane reduce per outer slice -> lane-dense (4, 128) row.
        out_ref[0] = jnp.sum(acc_ref[...], axis=1)


def combined_loss(y_pred, y_true, *,
                  dice_loss_weight=0.5, focal_loss_weight=0.5,
                  smooth=1.0, gamma=2.0, alpha=1.0):
    """Pallas implementation of CombinedLoss.forward (NCHW or any shape)."""
    if isinstance(alpha, (tuple, list)):
        alpha0, alpha1 = float(alpha[0]), float(alpha[1])
    else:
        alpha0 = alpha1 = float(alpha)

    n = y_pred.size
    assert n > 0
    unit = _SUBLANES * _LANES                    # 1024 elements per (8,128) tile
    units = pl.cdiv(n, unit)

    chunk = min(_MAX_CHUNK, units)               # (8,128)-tiles per block
    n_tiles = pl.cdiv(units, chunk)
    n_outer = 2 if n_tiles >= 2 else 1           # v7x: 2 TCs; harmless elsewhere
    n_inner = pl.cdiv(n_tiles, n_outer)
    padded_units = n_outer * n_inner * chunk
    padded_n = padded_units * unit

    flat_pred = y_pred.reshape(-1)
    flat_true = y_true.reshape(-1)
    pad = padded_n - n
    if pad:
        flat_pred = jnp.pad(flat_pred, (0, pad), constant_values=_PAD_LOGIT)
        flat_true = jnp.pad(flat_true, (0, pad), constant_values=0)
    pred3d = flat_pred.reshape(padded_units, _SUBLANES, _LANES)
    true3d = flat_true.reshape(padded_units, _SUBLANES, _LANES)

    kernel = functools.partial(
        _combined_loss_sums_kernel,
        gamma=float(gamma), alpha0=alpha0, alpha1=alpha1)

    in_map = lambda o, i: (o * n_inner + i, 0, 0)
    partials = pl.pallas_call(
        kernel,
        out_shape=jax.ShapeDtypeStruct((n_outer, 4, _LANES), jnp.float32),
        grid_spec=pltpu.PrefetchScalarGridSpec(
            num_scalar_prefetch=0,
            grid=(n_outer, n_inner),
            in_specs=[
                pl.BlockSpec((chunk, _SUBLANES, _LANES), in_map),
                pl.BlockSpec((chunk, _SUBLANES, _LANES), in_map),
            ],
            out_specs=pl.BlockSpec((1, 4, _LANES), lambda o, i: (o, 0, 0)),
            scratch_shapes=[pltpu.VMEM((4, _SUBLANES, _LANES), jnp.float32)],
        ),
        compiler_params=pltpu.CompilerParams(
            dimension_semantics=("parallel", "arbitrary")),
    )(pred3d, true3d)

    # Tiny epilogue in plain JAX: cross-lane reduce of the (n_outer, 4, 128)
    # partial sums plus the scalar dice/focal combine.
    sums = jnp.sum(partials, axis=(0, 2))        # (4,)
    inter, sum_p, sum_y, sum_f = sums[0], sums[1], sums[2], sums[3]
    dice = (2.0 * inter + smooth) / (sum_p + sum_y + smooth)
    dice_loss = 1.0 - dice
    focal_loss = sum_f / n                       # reduction='mean'
    return dice_loss_weight * dice_loss + focal_loss_weight * focal_loss


def _reference_combined_loss(y_pred, y_true, *, dice_loss_weight=0.5,
                             focal_loss_weight=0.5, smooth=1.0, gamma=2.0,
                             alpha=1.0):
    """Pure-JAX reference mirroring the PyTorch module (for validation)."""
    x = y_pred.astype(jnp.float32).ravel()
    y = y_true.astype(jnp.float32).ravel()
    p = jax.nn.sigmoid(x)
    inter = jnp.sum(p * y)
    dice = (2.0 * inter + smooth) / (jnp.sum(p) + jnp.sum(y) + smooth)
    dice_loss = 1.0 - dice
    bce = jnp.maximum(x, 0.0) - x * y + jnp.log1p(jnp.exp(-jnp.abs(x)))
    p_t = jnp.exp(-bce)
    if isinstance(alpha, (tuple, list)):
        a0, a1 = float(alpha[0]), float(alpha[1])
    else:
        a0 = a1 = float(alpha)
    focal = (a1 * y + a0 * (1.0 - y)) * (1.0 - p_t) ** gamma * bce
    focal_loss = jnp.mean(focal)
    return dice_loss_weight * dice_loss + focal_loss_weight * focal_loss


if __name__ == "__main__":
    key = jax.random.PRNGKey(0)
    k1, k2 = jax.random.split(key)
    # Binary segmentation: logits (B, 1, H, W), targets in {0, 1}.
    B, C, H, W = 2, 1, 16, 16
    y_pred = jax.random.normal(k1, (B, C, H, W), dtype=jnp.float32) * 2.0
    y_true = (jax.random.uniform(k2, (B, C, H, W)) > 0.5).astype(jnp.float32)

    loss = combined_loss(y_pred, y_true)
    loss = jax.block_until_ready(loss)

    ref = _reference_combined_loss(y_pred, y_true)
    assert jnp.allclose(loss, ref, rtol=1e-5, atol=1e-5), (loss, ref)
    print("KERNEL_OK")
</pallas_src>

<mosaic_0001>
module attributes {stable_mosaic.version = 11 : i64} {
  func.func @_combined_loss_sums_kernel(%arg0: i32, %arg1: i32, %arg2: memref<1x8x128xf32, #tpu.memory_space<vmem>>, %arg3: memref<1x8x128xf32, #tpu.memory_space<vmem>>, %arg4: memref<1x4x128xf32, #tpu.memory_space<vmem>>, %arg5: memref<4x8x128xf32, #tpu.memory_space<vmem>>) attributes {dimension_semantics = [#tpu.dimension_semantics<parallel>, #tpu.dimension_semantics<arbitrary>], iteration_bounds = array<i64: 1, 1>, scalar_prefetch = 0 : i64, scratch_operands = 1 : i64, tpu.core_type = #tpu.core_type<tc>, window_params = [{transform_indices = @transform_0, window_bounds = array<i64: 1, 8, 128>}, {transform_indices = @transform_1, window_bounds = array<i64: 1, 8, 128>}, {transform_indices = @transform_2, window_bounds = array<i64: 1, 4, 128>}]} {
    %c0_i32 = arith.constant 0 : i32
    %0 = arith.cmpi eq, %arg1, %c0_i32 : i32
    %1 = arith.extui %0 : i1 to i32
    %c0_i32_0 = arith.constant 0 : i32
    %2 = arith.cmpi ne, %1, %c0_i32_0 : i32
    scf.if %2 {
      %cst_42 = arith.constant 0.000000e+00 : f32
      %70 = vector.broadcast %cst_42 : f32 to vector<4x8x128xf32>
      %c0_43 = arith.constant 0 : index
      %c0_44 = arith.constant 0 : index
      %c0_45 = arith.constant 0 : index
      %71 = vector.load %arg5[%c0_43, %c0_44, %c0_45] : memref<4x8x128xf32, #tpu.memory_space<vmem>>, vector<4x8x128xf32>
      tpu.vector_store %arg5[%c0_43, %c0_44, %c0_45], %70 {strides = array<i32>} : memref<4x8x128xf32, #tpu.memory_space<vmem>>, vector<4x8x128xf32>,
    } else {
    }
    %c0 = arith.constant 0 : index
    %c0_1 = arith.constant 0 : index
    %c0_2 = arith.constant 0 : index
    %3 = vector.load %arg2[%c0, %c0_1, %c0_2] : memref<1x8x128xf32, #tpu.memory_space<vmem>>, vector<1x8x128xf32>
    %c0_3 = arith.constant 0 : index
    %c0_4 = arith.constant 0 : index
    %c0_5 = arith.constant 0 : index
    %4 = vector.load %arg3[%c0_3, %c0_4, %c0_5] : memref<1x8x128xf32, #tpu.memory_space<vmem>>, vector<1x8x128xf32>
    %5 = math.absf %3 : vector<1x8x128xf32>
    %cst = arith.constant 0.000000e+00 : f32
    %6 = vector.broadcast %cst : f32 to vector<1x8x128xf32>
    %7 = arith.subf %6, %5 : vector<1x8x128xf32>
    %8 = math.exp %7 : vector<1x8x128xf32>
    %cst_6 = arith.constant 1.000000e+00 : f32
    %9 = vector.broadcast %cst_6 : f32 to vector<1x8x128xf32>
    %10 = arith.addf %9, %8 : vector<1x8x128xf32>
    %cst_7 = arith.constant 1.000000e+00 : f32
    %11 = vector.broadcast %cst_7 : f32 to vector<1x8x128xf32>
    %12 = arith.divf %11, %10 : vector<1x8x128xf32>
    %cst_8 = arith.constant 0.000000e+00 : f32
    %13 = vector.broadcast %cst_8 : f32 to vector<1x8x128xf32>
    %14 = arith.cmpf oge, %3, %13 : vector<1x8x128xf32>
    %15 = arith.mulf %8, %12 : vector<1x8x128xf32>
    %16 = arith.select %14, %12, %15 : vector<1x8x128xi1>, vector<1x8x128xf32>
    %cst_9 = arith.constant 0.000000e+00 : f32
    %17 = vector.broadcast %cst_9 : f32 to vector<1x8x128xf32>
    %18 = arith.maximumf %3, %17 : vector<1x8x128xf32>
    %19 = arith.mulf %3, %4 : vector<1x8x128xf32>
    %20 = arith.subf %18, %19 : vector<1x8x128xf32>
    %21 = math.log1p %8 : vector<1x8x128xf32>
    %22 = arith.addf %20, %21 : vector<1x8x128xf32>
    %cst_10 = arith.constant 0.000000e+00 : f32
    %23 = vector.broadcast %cst_10 : f32 to vector<1x8x128xf32>
    %24 = arith.subf %23, %22 : vector<1x8x128xf32>
    %25 = math.exp %24 : vector<1x8x128xf32>
    %cst_11 = arith.constant 1.000000e+00 : f32
    %26 = vector.broadcast %cst_11 : f32 to vector<1x8x128xf32>
    %27 = arith.subf %26, %25 : vector<1x8x128xf32>
    %28 = arith.mulf %27, %27 : vector<1x8x128xf32>
    %cst_12 = arith.constant 1.000000e+00 : f32
    %29 = vector.broadcast %cst_12 : f32 to vector<1x8x128xf32>
    %30 = arith.mulf %29, %4 : vector<1x8x128xf32>
    %cst_13 = arith.constant 1.000000e+00 : f32
    %31 = vector.broadcast %cst_13 : f32 to vector<1x8x128xf32>
    %32 = arith.subf %31, %4 : vector<1x8x128xf32>
    %cst_14 = arith.constant 1.000000e+00 : f32
    %33 = vector.broadcast %cst_14 : f32 to vector<1x8x128xf32>
    %34 = arith.mulf %33, %32 : vector<1x8x128xf32>
    %35 = arith.addf %30, %34 : vector<1x8x128xf32>
    %36 = arith.mulf %35, %28 : vector<1x8x128xf32>
    %37 = arith.mulf %36, %22 : vector<1x8x128xf32>
    %c0_15 = arith.constant 0 : index
    %c0_16 = arith.constant 0 : index
    %c0_17 = arith.constant 0 : index
    %38 = vector.load %arg5[%c0_15, %c0_16, %c0_17] : memref<4x8x128xf32, #tpu.memory_space<vmem>>, vector<1x8x128xf32>
    %39 = vector.shape_cast %38 : vector<1x8x128xf32> to vector<8x128xf32>
    %40 = arith.mulf %16, %4 : vector<1x8x128xf32>
    %cst_18 = arith.constant dense<0.000000e+00> : vector<8x128xf32>
    %41 = vector.multi_reduction <add>, %40, %cst_18 [0] : vector<1x8x128xf32> to vector<8x128xf32>
    %42 = arith.addf %39, %41 : vector<8x128xf32>
    %c0_19 = arith.constant 0 : index
    %c0_20 = arith.constant 0 : index
    %c0_21 = arith.constant 0 : index
    %43 = vector.load %arg5[%c0_19, %c0_20, %c0_21] : memref<4x8x128xf32, #tpu.memory_space<vmem>>, vector<1x8x128xf32>
    %44 = vector.shape_cast %43 : vector<1x8x128xf32> to vector<8x128xf32>
    %45 = vector.shape_cast %42 : vector<8x128xf32> to vector<1x8x128xf32>
    tpu.vector_store %arg5[%c0_19, %c0_20, %c0_21], %45 {strides = array<i32>} : memref<4x8x128xf32, #tpu.memory_space<vmem>>, vector<1x8x128xf32>,
    %c1 = arith.constant 1 : index
    %c0_22 = arith.constant 0 : index
    %c0_23 = arith.constant 0 : index
    %46 = vector.load %arg5[%c1, %c0_22, %c0_23] : memref<4x8x128xf32, #tpu.memory_space<vmem>>, vector<1x8x128xf32>
    %47 = vector.shape_cast %46 : vector<1x8x128xf32> to vector<8x128xf32>
    %cst_24 = arith.constant dense<0.000000e+00> : vector<8x128xf32>
    %48 = vector.multi_reduction <add>, %16, %cst_24 [0] : vector<1x8x128xf32> to vector<8x128xf32>
    %49 = arith.addf %47, %48 : vector<8x128xf32>
    %c1_25 = arith.constant 1 : index
    %c0_26 = arith.constant 0 : index
    %c0_27 = arith.constant 0 : index
    %50 = vector.load %arg5[%c1_25, %c0_26, %c0_27] : memref<4x8x128xf32, #tpu.memory_space<vmem>>, vector<1x8x128xf32>
    %51 = vector.shape_cast %50 : vector<1x8x128xf32> to vector<8x128xf32>
    %52 = vector.shape_cast %49 : vector<8x128xf32> to vector<1x8x128xf32>
    tpu.vector_store %arg5[%c1_25, %c0_26, %c0_27], %52 {strides = array<i32>} : memref<4x8x128xf32, #tpu.memory_space<vmem>>, vector<1x8x128xf32>,
    %c2 = arith.constant 2 : index
    %c0_28 = arith.constant 0 : index
    %c0_29 = arith.constant 0 : index
    %53 = vector.load %arg5[%c2, %c0_28, %c0_29] : memref<4x8x128xf32, #tpu.memory_space<vmem>>, vector<1x8x128xf32>
    %54 = vector.shape_cast %53 : vector<1x8x128xf32> to vector<8x128xf32>
    %cst_30 = arith.constant dense<0.000000e+00> : vector<8x128xf32>
    %55 = vector.multi_reduction <add>, %4, %cst_30 [0] : vector<1x8x128xf32> to vector<8x128xf32>
    %56 = arith.addf %54, %55 : vector<8x128xf32>
    %c2_31 = arith.constant 2 : index
    %c0_32 = arith.constant 0 : index
    %c0_33 = arith.constant 0 : index
    %57 = vector.load %arg5[%c2_31, %c0_32, %c0_33] : memref<4x8x128xf32, #tpu.memory_space<vmem>>, vector<1x8x128xf32>
    %58 = vector.shape_cast %57 : vector<1x8x128xf32> to vector<8x128xf32>
    %59 = vector.shape_cast %56 : vector<8x128xf32> to vector<1x8x128xf32>
    tpu.vector_store %arg5[%c2_31, %c0_32, %c0_33], %59 {strides = array<i32>} : memref<4x8x128xf32, #tpu.memory_space<vmem>>, vector<1x8x128xf32>,
    %c3 = arith.constant 3 : index
    %c0_34 = arith.constant 0 : index
    %c0_35 = arith.constant 0 : index
    %60 = vector.load %arg5[%c3, %c0_34, %c0_35] : memref<4x8x128xf32, #tpu.memory_space<vmem>>, vector<1x8x128xf32>
    %61 = vector.shape_cast %60 : vector<1x8x128xf32> to vector<8x128xf32>
    %cst_36 = arith.constant dense<0.000000e+00> : vector<8x128xf32>
    %62 = vector.multi_reduction <add>, %37, %cst_36 [0] : vector<1x8x128xf32> to vector<8x128xf32>
    %63 = arith.addf %61, %62 : vector<8x128xf32>
    %c3_37 = arith.constant 3 : index
    %c0_38 = arith.constant 0 : index
    %c0_39 = arith.constant 0 : index
    %64 = vector.load %arg5[%c3_37, %c0_38, %c0_39] : memref<4x8x128xf32, #tpu.memory_space<vmem>>, vector<1x8x128xf32>
    %65 = vector.shape_cast %64 : vector<1x8x128xf32> to vector<8x128xf32>
    %66 = vector.shape_cast %63 : vector<8x128xf32> to vector<1x8x128xf32>
    tpu.vector_store %arg5[%c3_37, %c0_38, %c0_39], %66 {strides = array<i32>} : memref<4x8x128xf32, #tpu.memory_space<vmem>>, vector<1x8x128xf32>,
    %c0_i32_40 = arith.constant 0 : i32
    %67 = arith.cmpi eq, %arg1, %c0_i32_40 : i32
    %68 = arith.extui %67 : i1 to i32
    %c0_i32_41 = arith.constant 0 : i32
    %69 = arith.cmpi ne, %68, %c0_i32_41 : i32
    scf.if %69 {
      %c0_42 = arith.constant 0 : index
      %c0_43 = arith.constant 0 : index
      %c0_44 = arith.constant 0 : index
      %70 = vector.load %arg5[%c0_42, %c0_43, %c0_44] : memref<4x8x128xf32, #tpu.memory_space<vmem>>, vector<4x8x128xf32>
      %cst_45 = arith.constant dense<0.000000e+00> : vector<4x128xf32>
      %71 = vector.multi_reduction <add>, %70, %cst_45 [1] : vector<4x8x128xf32> to vector<4x128xf32>
      %c0_46 = arith.constant 0 : index
      %c0_47 = arith.constant 0 : index
      %c0_48 = arith.constant 0 : index
      %72 = vector.load %arg4[%c0_46, %c0_47, %c0_48] : memref<1x4x128xf32, #tpu.memory_space<vmem>>, vector<1x4x128xf32>
      %73 = vector.shape_cast %72 : vector<1x4x128xf32> to vector<4x128xf32>
      %74 = vector.shape_cast %71 : vector<4x128xf32> to vector<1x4x128xf32>
      tpu.vector_store %arg4[%c0_46, %c0_47, %c0_48], %74 {strides = array<i32>} : memref<1x4x128xf32, #tpu.memory_space<vmem>>, vector<1x4x128xf32>,
    } else {
    }
    return
  }
  func.func @transform_0(%arg0: i32, %arg1: i32) -> (i32, i32, i32) {
    %c1_i32 = arith.constant 1 : i32
    %0 = arith.muli %arg0, %c1_i32 : i32
    %1 = arith.addi %0, %arg1 : i32
    %c0_i32 = arith.constant 0 : i32
    %c0_i32_0 = arith.constant 0 : i32
    %c0_i32_1 = arith.constant 0 : i32
    return %1, %c0_i32, %c0_i32_0 : i32, i32, i32
  }
  func.func @transform_1(%arg0: i32, %arg1: i32) -> (i32, i32, i32) {
    %c1_i32 = arith.constant 1 : i32
    %0 = arith.muli %arg0, %c1_i32 : i32
    %1 = arith.addi %0, %arg1 : i32
    %c0_i32 = arith.constant 0 : i32
    %c0_i32_0 = arith.constant 0 : i32
    %c0_i32_1 = arith.constant 0 : i32
    return %1, %c0_i32, %c0_i32_0 : i32, i32, i32
  }
  func.func @transform_2(%arg0: i32, %arg1: i32) -> (i32, i32, i32) {
    %c0_i32 = arith.constant 0 : i32
    %c0_i32_0 = arith.constant 0 : i32
    %c0_i32_1 = arith.constant 0 : i32
    return %arg0, %c0_i32, %c0_i32_0 : i32, i32, i32
  }
}

</mosaic_0001>

<llo_original>
// kernel: tpu_custom_call.1
$region0: #{tpu_custom_call.1}
  #allocation0 [shape = 'u32[]', space=smem, size = 0x4, offset = 0x4, fixed_abs, tag = 'smem constant byte address 0x4 - core index']
  #allocation1 [shape = 'u32[144,128]{1,0:T(1,128)}', space=vmem, size = 0x12000, scoped, tag = 'internal scratch']
  #allocation2 [shape = 'f32[4,8,128]{2,1,0:T(8,128)}', space=vmem, size = 0x4000, scoped, tag = 'scratch operand']
  %s0 = inlined_call_operand.hbm [shape: f32[1,8,128], index: 0, kind: input, shape index: {}]
  %s1 = inlined_call_operand.hbm [shape: f32[1,8,128], index: 1, kind: input, shape index: {}]
  %s2 = inlined_call_operand.hbm [shape: f32[1,4,128], index: 2, kind: output, shape index: {}]
  %s3 = sld [smem:[#allocation0]]
  $region34: #{tpu_custom_call.1} parent=0
    _
  %s5 = ssub.s32 1, %s3
  %s6 = scalar_select 0, %s5, %s3
  $region1: #{tpu_custom_call.1} parent=0
    #allocation3 [shape = 'u8[4096]{0}', space=vmem, size = 0x1000, scoped, tag = 'input window, operand 0, single buffered']
    #allocation4 [shape = 's32[1]{0}', space=sflag, size = 0x4, scoped, tag = 'scoped memory for tpu_custom_call.1']
    #allocation5 [shape = 's32[1]{0}', space=sflag, size = 0x4, scoped, tag = 'scoped memory for tpu_custom_call.1']
    #allocation6 [shape = 'u8[4096]{0}', space=vmem, size = 0x1000, scoped, tag = 'input window, operand 1, single buffered']
    #allocation7 [shape = 's32[1]{0}', space=sflag, size = 0x4, scoped, tag = 'scoped memory for tpu_custom_call.1']
    #allocation8 [shape = 'u8[2048]{0}', space=vmem, size = 0x800, scoped, tag = 'output window, operand 0, single buffered']
    %7 = vsyncpa [#allocation4], 0
    %8 = vsyncpa [#allocation7], 0
    %9 = vsyncpa [#allocation5], 0
    // Predicated region
    $region2: #{tpu_custom_call.1} parent=1 // pred_check
      _
    $region3: #{tpu_custom_call.1} parent=1 // pred_check_branch
      %11 = sbr.rel (0) target = $region5
    $region4: #{tpu_custom_call.1} parent=1 // pred_region
      %s12 = sadd.s32 0, 0
      %s14 = ssub.s32 128, 128
      %15 = vsyncadd [#allocation4], %s14
      %s16 = smul.addr %s12, 128
      %s17 = scalar_lea.hbm %s0, %s16
      %s19 = sshll.u32 [#allocation3], 4
      %s20 = int_to_ptr.vmem [resolvable:$true] %s19
      %22 = dma.hbm_to_vmem [thread:$0]  %s17, 128, %s20, [#allocation4]
    $region5: #{tpu_custom_call.1} parent=1 // pred_fallthru
      _
    // Predicated region
    $region6: #{tpu_custom_call.1} parent=1 // pred_check
      _
    $region7: #{tpu_custom_call.1} parent=1 // pred_check_branch
      %24 = sbr.rel (0) target = $region9
    $region8: #{tpu_custom_call.1} parent=1 // pred_region
      %s25 = sadd.s32 0, 0
      %s27 = ssub.s32 128, 128
      %28 = vsyncadd [#allocation7], %s27
      %s29 = smul.addr %s25, 128
      %s30 = scalar_lea.hbm %s1, %s29
      %s32 = sshll.u32 [#allocation6], 4
      %s33 = int_to_ptr.vmem [resolvable:$true] %s32
      %35 = dma.hbm_to_vmem [thread:$0]  %s30, 128, %s33, [#allocation7]
    $region9: #{tpu_custom_call.1} parent=1 // pred_fallthru
      _
    // Predicated region
    $region10: #{tpu_custom_call.1} parent=1 // pred_check
      _
    $region11: #{tpu_custom_call.1} parent=1 // pred_check_branch
      %37 = sbr.rel (0) target = $region13
    $region12: #{tpu_custom_call.1} parent=1 // pred_region
      %38 = dma.done [#allocation4], 128
    $region13: #{tpu_custom_call.1} parent=1 // pred_fallthru
      _
    // Predicated region
    $region14: #{tpu_custom_call.1} parent=1 // pred_check
      _
    $region15: #{tpu_custom_call.1} parent=1 // pred_check_branch
      %40 = sbr.rel (0) target = $region17
    $region16: #{tpu_custom_call.1} parent=1 // pred_region
      %41 = dma.done [#allocation7], 128
    $region17: #{tpu_custom_call.1} parent=1 // pred_fallthru
      _
    %s42 = sadd.s32 0, 0
    %s43 = sadd.s32 0, 0
    %p44 = scmp.eq.s32.totalorder 0, 0
    // Predicated region
    $region18: #{tpu_custom_call.1} parent=1 // pred_check
      %p45 = pneg %p44
    $region19: #{tpu_custom_call.1} parent=1 // pred_check_branch
      %47 = sbr.rel (%p45) target = $region21
    $region20: #{tpu_custom_call.1} parent=1 // pred_region
      %48 = vst [vmem:[#allocation2] sm:$0xff] 0.0
      %49 = vst [vmem:[#allocation2 + $0x8] sm:$0xff] 0.0
      %50 = vst [vmem:[#allocation2 + $0x10] sm:$0xff] 0.0
      %51 = vst [vmem:[#allocation2 + $0x18] sm:$0xff] 0.0
    $region21: #{tpu_custom_call.1} parent=1 // pred_fallthru
      _
    %v52 = vld [vmem:[#allocation3] sm:$0xff]
    %v53 = vld [vmem:[#allocation6] sm:$0xff]
    %v54 = vand.u32 2147483647, %v52
    %v55 = vsub.f32 0.0, %v54
    %v56 = vmul.f32 %v55, 1.442695
    %v57 = vpow.pop %v56
    %v58 = vadd.f32 %v57, 1.0
    %v59 = vrcp.pop %v58
    %v60 = vmul.f32 1.0, %v59
    %vm61 = vcmp.ge.f32.partialorder %v52, 0.0
    %v62 = vmul.f32 %v57, %v60
    %v63 = vsel %vm61, %v60, %v62
    %v64 = vmax.f32 %v52, 0.0
    %v65 = vmul.f32 %v52, %v53
    %v66 = vsub.f32 %v64, %v65
    %v67 = vadd.f32 %v57, 1.0
    %v68 = vlog2.pop %v67
    %v69 = vmul.f32 %v68, 0.6931472
    %v70 = vmul.f32 -0.5, %v57
    %v71 = vadd.f32 %v70, 1.0
    %v72 = vmul.f32 %v71, %v57
    %v73 = vand.u32 2147483647, %v57
    %vm74 = vcmp.lt.f32.partialorder %v73, 0.0004427343
    %v75 = vsel %vm74, %v72, %v69
    %v76 = vadd.f32 %v66, %v75
    %v77 = vsub.f32 0.0, %v76
    %v78 = vmul.f32 %v77, 1.442695
    %v79 = vpow.pop %v78
    %v80 = vsub.f32 1.0, %v79
    %v81 = vmul.f32 %v80, %v80
    %v82 = vsub.f32 1.0, %v53
    %v83 = vadd.f32 %v53, %v82
    %v84 = vmul.f32 %v83, %v81
    %v85 = vmul.f32 %v84, %v76
    %v86 = vld [vmem:[#allocation2] sm:$0xff]
    %v87 = vmul.f32 %v63, %v53
    %v88 = vadd.f32 %v87, 0.0
    %v89 = vadd.f32 %v86, %v88
    %90 = vst [vmem:[#allocation2] sm:$0xff] %v89
    %s91 = scalar_lea.vmem [#allocation2], 8
    %v92 = vld [vmem:[%s91] sm:$0xff]
    %v93 = vadd.f32 %v63, 0.0
    %v94 = vadd.f32 %v92, %v93
    %95 = vst [vmem:[%s91] sm:$0xff] %v94
    %s96 = scalar_lea.vmem [#allocation2], 16
    %v97 = vld [vmem:[%s96] sm:$0xff]
    %v98 = vadd.f32 %v53, 0.0
    %v99 = vadd.f32 %v97, %v98
    %100 = vst [vmem:[%s96] sm:$0xff] %v99
    %s101 = scalar_lea.vmem [#allocation2], 24
    %v102 = vld [vmem:[%s101] sm:$0xff]
    %v103 = vadd.f32 %v85, 0.0
    %v104 = vadd.f32 %v102, %v103
    %105 = vst [vmem:[%s101] sm:$0xff] %v104
    // Predicated region
    $region22: #{tpu_custom_call.1} parent=1 // pred_check
      %p106 = pneg %p44
    $region23: #{tpu_custom_call.1} parent=1 // pred_check_branch
      %108 = sbr.rel (%p106) target = $region25
    $region24: #{tpu_custom_call.1} parent=1 // pred_region
      %v109 = vld [vmem:[#allocation2] sm:$0xff]
      %v110 = vld [vmem:[#allocation2 + $0x8] sm:$0xff]
      %v111 = vld [vmem:[#allocation2 + $0x10] sm:$0xff]
      %v112 = vld [vmem:[#allocation2 + $0x18] sm:$0xff]
      %v113 = vrot.slane %v109, 4
      %v114 = vadd.f32 %v109, %v113
      %v115 = vrot.slane %v114, 2
      %v116 = vadd.f32 %v114, %v115
      %v117 = vrot.slane %v116, 1
      %v118 = vadd.f32 %v116, %v117
      %v119 = vrot.slane %v110, 4
      %v120 = vadd.f32 %v110, %v119
      %v121 = vrot.slane %v120, 2
      %v122 = vadd.f32 %v120, %v121
      %v123 = vrot.slane %v122, 1
      %v124 = vadd.f32 %v122, %v123
      %v125 = vrot.slane %v111, 4
      %v126 = vadd.f32 %v111, %v125
      %v127 = vrot.slane %v126, 2
      %v128 = vadd.f32 %v126, %v127
      %v129 = vrot.slane %v128, 1
      %v130 = vadd.f32 %v128, %v129
      %v131 = vrot.slane %v112, 4
      %v132 = vadd.f32 %v112, %v131
      %v133 = vrot.slane %v132, 2
      %v134 = vadd.f32 %v132, %v133
      %v135 = vrot.slane %v134, 1
      %v136 = vadd.f32 %v134, %v135
      %vm141 = vcmask 1041409
      %v142 = vsel %vm141, %v124, %v118
      %vm143 = vcmask 1042434
      %v144 = vsel %vm143, %v130, %v142
      %vm145 = vcmask 1043459
      %v146 = vsel %vm145, %v136, %v144
      %148 = vst [vmem:[#allocation8] sm:$0xf] %v146
    $region25: #{tpu_custom_call.1} parent=1 // pred_fallthru
      _
    // Predicated region
    $region26: #{tpu_custom_call.1} parent=1 // pred_check
      _
    $region27: #{tpu_custom_call.1} parent=1 // pred_check_branch
      %150 = sbr.rel (0) target = $region29
    $region28: #{tpu_custom_call.1} parent=1 // pred_region
      %s152 = ssub.s32 64, 64
      %153 = vsyncadd [#allocation5], %s152
      %s155 = sshll.u32 [#allocation8], 4
      %s156 = int_to_ptr.vmem [resolvable:$true] %s155
      %158 = dma.vmem_to_hbm [thread:$0]  %s156, 64, %s2, [#allocation5]
    $region29: #{tpu_custom_call.1} parent=1 // pred_fallthru
      _
    // Predicated region
    $region30: #{tpu_custom_call.1} parent=1 // pred_check
      _
    $region31: #{tpu_custom_call.1} parent=1 // pred_check_branch
      %160 = sbr.rel (0) target = $region33
    $region32: #{tpu_custom_call.1} parent=1 // pred_region
      %161 = dma.done [#allocation5], 64
    $region33: #{tpu_custom_call.1} parent=1 // pred_fallthru
      _
    %162 = vsyncpa [#allocation4], 1
    %163 = vsyncpa [#allocation7], 1
    %164 = vsyncpa [#allocation5], 1

</llo_original>
